<compile_context>
chip_gen: v5e
topology: v5e:2x2
jax: 0.10.0
libtpu: 0.0.40
codegen_flags: <defaults>
</compile_context>

<pallas_src>
import functools

import jax
import jax.numpy as jnp
from jax.experimental import pallas as pl
from jax.experimental.pallas import tpu as pltpu


def _round_up(x, m):
    return ((x + m - 1) // m) * m


def mlp_kernel(x_ref, w1_ref, b1_ref, w2_ref, b2_ref, w3t_ref, b3_ref, o_ref):
    cd = w1_ref.dtype  # MXU compute dtype (bf16 by default, f32 if requested)

    # Layer 1: cast x in-kernel (VPU); the ragged K=201 contraction is handled by the MXU
    # lowering, so no K padding of x/w1 is needed anywhere.
    x = x_ref[...].astype(cd)
    h1 = jnp.dot(x, w1_ref[...], preferred_element_type=jnp.float32)
    h1 = jnp.maximum(h1 + b1_ref[...], 0.0).astype(cd)  # bias+ReLU in f32, then narrow

    # Layer 2.
    h2 = jnp.dot(h1, w2_ref[...], preferred_element_type=jnp.float32)
    h2 = jnp.maximum(h2 + b2_ref[...], 0.0).astype(cd)

    # Layer 3, computed transposed: (3, 256) x (tb, 256)^T -> (3, tb).  Batch lands on the
    # lane (last) dim of the store, so the output write is lane-dense with only the 3 real
    # output features stored (12 B/row instead of a 128-lane-padded 512 B/row).
    out_t = jax.lax.dot_general(
        w3t_ref[...], h2,
        dimension_numbers=(((1,), (1,)), ((), ())),
        preferred_element_type=jnp.float32,
    )
    o_ref[...] = out_t + b3_ref[...]


def prepare_params(w1, b1, w2, b2, w3, b3, compute_dtype=jnp.bfloat16):
    """One-time parameter prep (hoisted out of the jitted forward, per perf review):
    cast weights to the MXU compute dtype, transpose w3 for the lane-dense (3, B) output,
    keep biases in f32 (bias add / ReLU run in f32 on the VPU)."""
    return (
        jnp.asarray(w1, compute_dtype),
        jnp.asarray(b1, jnp.float32).reshape(1, -1),
        jnp.asarray(w2, compute_dtype),
        jnp.asarray(b2, jnp.float32).reshape(1, -1),
        jnp.asarray(w3, compute_dtype).T,            # (3, 256)
        jnp.asarray(b3, jnp.float32).reshape(-1, 1),  # (3, 1) column bias
    )


@functools.partial(jax.jit, static_argnames=("tile_b",))
def surrogate_net_forward(x, w1, b1, w2, b2, w3t, b3c, *, tile_b=4096):
    """Fused MLP forward.  Parameters must come from prepare_params()."""
    B, F = x.shape
    H = w1.shape[1]
    N = w3t.shape[0]

    # Batch tile: big enough to amortize the ~0.35us fixed per-grid-step cost, a multiple of
    # 128 so the transposed (N, tb) output block is lane-aligned, and capped at ceil(B/2) so
    # the "parallel" batch axis has >= 2 steps for v7x's 2 TensorCores.  For small B a single
    # full-array block is used (block dims equal to the array dims are always legal).
    max_tile = min(_round_up(tile_b, 128), _round_up(pl.cdiv(B, 2), 128))
    tb = B if B <= max_tile else max_tile
    grid = (pl.cdiv(B, tb),)

    compute_dtype = jnp.dtype(w1.dtype)
    itemsize = compute_dtype.itemsize
    weight_bytes = (F * H + H * H + N * H) * itemsize + (2 * H + N) * 4

    flops = 2 * B * (F * H + H * H + H * N)
    bytes_accessed = x.size * x.dtype.itemsize + weight_bytes + N * B * 4

    # Explicit VMEM budget: x/out double-buffered + resident weights + live h1/h2 (+headroom),
    # so large tiles compile on v5e (16 MiB default scoped VMEM) and stay < v7x's 64 MiB phys.
    vmem_est = (
        2 * tb * F * x.dtype.itemsize
        + 2 * N * tb * 4
        + 2 * weight_bytes
        + 4 * tb * H * 4
    )
    vmem_limit = int(min(max(vmem_est, 32 * 1024 * 1024), 56 * 1024 * 1024))

    out_t = pl.pallas_call(
        mlp_kernel,
        out_shape=jax.ShapeDtypeStruct((N, B), jnp.float32),
        grid=grid,
        in_specs=[
            pl.BlockSpec((tb, F), lambda i: (i, 0)),   # x: tiled over batch, unpadded K=201
            pl.BlockSpec((F, H), lambda i: (0, 0)),    # w1: VMEM-resident
            pl.BlockSpec((1, H), lambda i: (0, 0)),    # b1 (f32)
            pl.BlockSpec((H, H), lambda i: (0, 0)),    # w2
            pl.BlockSpec((1, H), lambda i: (0, 0)),    # b2 (f32)
            pl.BlockSpec((N, H), lambda i: (0, 0)),    # w3^T
            pl.BlockSpec((N, 1), lambda i: (0, 0)),    # b3 column (f32)
        ],
        out_specs=pl.BlockSpec((N, tb), lambda i: (0, i)),  # (3, B): batch on lanes
        compiler_params=pltpu.CompilerParams(
            dimension_semantics=("parallel",),   # shard batch steps across v7x's 2 TCs
            vmem_limit_bytes=vmem_limit,
        ),
        cost_estimate=pl.CostEstimate(
            flops=flops, transcendentals=0, bytes_accessed=bytes_accessed
        ),
    )(x, w1, b1, w2, b2, w3t, b3c)

    # Tiny (3, B) -> (B, 3) transpose in the wrapper (12 B/row of traffic).
    return out_t.T


def init_params(key, input_size=201, hidden_size=256, output_size=3):
    """Deterministic synthetic parameters (nn.Linear semantics, stored as (in, out))."""
    k1, k2, k3, k4, k5, k6 = jax.random.split(key, 6)
    s1 = 1.0 / jnp.sqrt(input_size)
    s2 = 1.0 / jnp.sqrt(hidden_size)
    w1 = jax.random.uniform(k1, (input_size, hidden_size), jnp.float32, -s1, s1)
    b1 = jax.random.uniform(k2, (1, hidden_size), jnp.float32, -s1, s1)
    w2 = jax.random.uniform(k3, (hidden_size, hidden_size), jnp.float32, -s2, s2)
    b2 = jax.random.uniform(k4, (1, hidden_size), jnp.float32, -s2, s2)
    w3 = jax.random.uniform(k5, (hidden_size, output_size), jnp.float32, -s2, s2)
    b3 = jax.random.uniform(k6, (1, output_size), jnp.float32, -s2, s2)
    return w1, b1, w2, b2, w3, b3


def reference_forward(x, w1, b1, w2, b2, w3, b3, compute_dtype=jnp.float32):
    """Pure-JAX reference; compute_dtype mirrors the kernel's operand-dtype policy."""
    cd = compute_dtype
    h1 = jnp.dot(x.astype(cd), w1.astype(cd), preferred_element_type=jnp.float32) + b1
    h1 = jnp.maximum(h1, 0.0).astype(cd)
    h2 = jnp.dot(h1, w2.astype(cd), preferred_element_type=jnp.float32) + b2
    h2 = jnp.maximum(h2, 0.0).astype(cd)
    return jnp.dot(h2, w3.astype(cd), preferred_element_type=jnp.float32) + b3


if __name__ == "__main__":
    key = jax.random.PRNGKey(0)
    kx, kp = jax.random.split(key)

    batch = 8
    input_size, hidden_size, output_size = 201, 256, 3

    x = jax.random.normal(kx, (batch, input_size), jnp.float32)
    params = init_params(kp, input_size, hidden_size, output_size)
    kernel_params = prepare_params(*params, compute_dtype=jnp.bfloat16)

    out = surrogate_net_forward(x, *kernel_params)
    out = jax.block_until_ready(out)
    assert out.shape == (batch, output_size)

    # Reference with the same compute-dtype policy (bf16 MXU operands, f32 accumulation).
    ref_bf16 = reference_forward(x, *params, compute_dtype=jnp.bfloat16)
    assert jnp.allclose(out, ref_bf16, atol=2e-3, rtol=2e-3), "mismatch vs dtype-matched reference"

    # Full-f32 reference (original module semantics); looser tolerance covers bf16 operands.
    ref_f32 = reference_forward(x, *params, compute_dtype=jnp.float32)
    assert jnp.allclose(out, ref_f32, atol=5e-2, rtol=5e-2), "mismatch vs f32 reference"

    print("KERNEL_OK")
</pallas_src>

<mosaic_0001>
module attributes {stable_mosaic.version = 11 : i64} {
  func.func @mlp_kernel(%arg0: i32, %arg1: memref<8x201xf32, #tpu.memory_space<vmem>>, %arg2: memref<201x256xbf16, #tpu.memory_space<vmem>>, %arg3: memref<1x256xf32, #tpu.memory_space<vmem>>, %arg4: memref<256x256xbf16, #tpu.memory_space<vmem>>, %arg5: memref<1x256xf32, #tpu.memory_space<vmem>>, %arg6: memref<3x256xbf16, #tpu.memory_space<vmem>>, %arg7: memref<3x1xf32, #tpu.memory_space<vmem>>, %arg8: memref<3x8xf32, #tpu.memory_space<vmem>>) attributes {dimension_semantics = [#tpu.dimension_semantics<parallel>], iteration_bounds = array<i64: 1>, scalar_prefetch = 0 : i64, scratch_operands = 0 : i64, tpu.core_type = #tpu.core_type<tc>, window_params = [{transform_indices = @transform_0, window_bounds = array<i64: 8, 201>}, {pipeline_mode = #tpu.pipeline_mode<synchronous>, transform_indices = @transform_1, window_bounds = array<i64: 201, 256>}, {pipeline_mode = #tpu.pipeline_mode<synchronous>, transform_indices = @transform_2, window_bounds = array<i64: 1, 256>}, {pipeline_mode = #tpu.pipeline_mode<synchronous>, transform_indices = @transform_3, window_bounds = array<i64: 256, 256>}, {pipeline_mode = #tpu.pipeline_mode<synchronous>, transform_indices = @transform_4, window_bounds = array<i64: 1, 256>}, {pipeline_mode = #tpu.pipeline_mode<synchronous>, transform_indices = @transform_5, window_bounds = array<i64: 3, 256>}, {pipeline_mode = #tpu.pipeline_mode<synchronous>, transform_indices = @transform_6, window_bounds = array<i64: 3, 1>}, {transform_indices = @transform_7, window_bounds = array<i64: 3, 8>}]} {
    %c0 = arith.constant 0 : index
    %c0_0 = arith.constant 0 : index
    %0 = vector.load %arg1[%c0, %c0_0] : memref<8x201xf32, #tpu.memory_space<vmem>>, vector<8x201xf32>
    %1 = arith.truncf %0 : vector<8x201xf32> to vector<8x201xbf16>
    %c0_1 = arith.constant 0 : index
    %c0_2 = arith.constant 0 : index
    %2 = vector.load %arg2[%c0_1, %c0_2] : memref<201x256xbf16, #tpu.memory_space<vmem>>, vector<201x256xbf16>
    %cst = arith.constant dense<0.000000e+00> : vector<8x256xf32>
    %3 = tpu.matmul %1, %2, %cst {dimension_numbers = #tpu.dot_dimension_numbers<[1], [0], [0], [1], [0, 0, 1, 1], [], []>} : vector<8x201xbf16>, vector<201x256xbf16>, vector<8x256xf32> -> vector<8x256xf32>
    %c0_3 = arith.constant 0 : index
    %c0_4 = arith.constant 0 : index
    %4 = vector.load %arg3[%c0_3, %c0_4] : memref<1x256xf32, #tpu.memory_space<vmem>>, vector<1x256xf32>
    %5 = vector.broadcast %4 : vector<1x256xf32> to vector<8x256xf32>
    %6 = arith.addf %3, %5 : vector<8x256xf32>
    %cst_5 = arith.constant 0.000000e+00 : f32
    %7 = vector.broadcast %cst_5 : f32 to vector<8x256xf32>
    %8 = arith.maximumf %6, %7 : vector<8x256xf32>
    %9 = arith.truncf %8 : vector<8x256xf32> to vector<8x256xbf16>
    %c0_6 = arith.constant 0 : index
    %c0_7 = arith.constant 0 : index
    %10 = vector.load %arg4[%c0_6, %c0_7] : memref<256x256xbf16, #tpu.memory_space<vmem>>, vector<256x256xbf16>
    %cst_8 = arith.constant dense<0.000000e+00> : vector<8x256xf32>
    %11 = tpu.matmul %9, %10, %cst_8 {dimension_numbers = #tpu.dot_dimension_numbers<[1], [0], [0], [1], [0, 0, 1, 1], [], []>} : vector<8x256xbf16>, vector<256x256xbf16>, vector<8x256xf32> -> vector<8x256xf32>
    %c0_9 = arith.constant 0 : index
    %c0_10 = arith.constant 0 : index
    %12 = vector.load %arg5[%c0_9, %c0_10] : memref<1x256xf32, #tpu.memory_space<vmem>>, vector<1x256xf32>
    %13 = vector.broadcast %12 : vector<1x256xf32> to vector<8x256xf32>
    %14 = arith.addf %11, %13 : vector<8x256xf32>
    %cst_11 = arith.constant 0.000000e+00 : f32
    %15 = vector.broadcast %cst_11 : f32 to vector<8x256xf32>
    %16 = arith.maximumf %14, %15 : vector<8x256xf32>
    %17 = arith.truncf %16 : vector<8x256xf32> to vector<8x256xbf16>
    %c0_12 = arith.constant 0 : index
    %c0_13 = arith.constant 0 : index
    %18 = vector.load %arg6[%c0_12, %c0_13] : memref<3x256xbf16, #tpu.memory_space<vmem>>, vector<3x256xbf16>
    %cst_14 = arith.constant dense<0.000000e+00> : vector<3x8xf32>
    %19 = tpu.matmul %18, %17, %cst_14 {dimension_numbers = #tpu.dot_dimension_numbers<[1], [1], [0], [0], [0, 0, 1, 0], [], []>} : vector<3x256xbf16>, vector<8x256xbf16>, vector<3x8xf32> -> vector<3x8xf32>
    %c0_15 = arith.constant 0 : index
    %c0_16 = arith.constant 0 : index
    %20 = vector.load %arg7[%c0_15, %c0_16] : memref<3x1xf32, #tpu.memory_space<vmem>>, vector<3x1xf32>
    %21 = vector.broadcast %20 : vector<3x1xf32> to vector<3x8xf32>
    %22 = arith.addf %19, %21 : vector<3x8xf32>
    %c0_17 = arith.constant 0 : index
    %c0_18 = arith.constant 0 : index
    %23 = vector.load %arg8[%c0_17, %c0_18] : memref<3x8xf32, #tpu.memory_space<vmem>>, vector<3x8xf32>
    tpu.vector_store %arg8[%c0_17, %c0_18], %22 {strides = array<i32>} : memref<3x8xf32, #tpu.memory_space<vmem>>, vector<3x8xf32>,
    return
  }
  func.func @transform_0(%arg0: i32) -> (i32, i32) {
    %c0_i32 = arith.constant 0 : i32
    %c0_i32_0 = arith.constant 0 : i32
    return %arg0, %c0_i32 : i32, i32
  }
  func.func @transform_1(%arg0: i32) -> (i32, i32) {
    %c0_i32 = arith.constant 0 : i32
    %c0_i32_0 = arith.constant 0 : i32
    %c0_i32_1 = arith.constant 0 : i32
    return %c0_i32, %c0_i32_0 : i32, i32
  }
  func.func @transform_2(%arg0: i32) -> (i32, i32) {
    %c0_i32 = arith.constant 0 : i32
    %c0_i32_0 = arith.constant 0 : i32
    %c0_i32_1 = arith.constant 0 : i32
    return %c0_i32, %c0_i32_0 : i32, i32
  }
  func.func @transform_3(%arg0: i32) -> (i32, i32) {
    %c0_i32 = arith.constant 0 : i32
    %c0_i32_0 = arith.constant 0 : i32
    %c0_i32_1 = arith.constant 0 : i32
    return %c0_i32, %c0_i32_0 : i32, i32
  }
  func.func @transform_4(%arg0: i32) -> (i32, i32) {
    %c0_i32 = arith.constant 0 : i32
    %c0_i32_0 = arith.constant 0 : i32
    %c0_i32_1 = arith.constant 0 : i32
    return %c0_i32, %c0_i32_0 : i32, i32
  }
  func.func @transform_5(%arg0: i32) -> (i32, i32) {
    %c0_i32 = arith.constant 0 : i32
    %c0_i32_0 = arith.constant 0 : i32
    %c0_i32_1 = arith.constant 0 : i32
    return %c0_i32, %c0_i32_0 : i32, i32
  }
  func.func @transform_6(%arg0: i32) -> (i32, i32) {
    %c0_i32 = arith.constant 0 : i32
    %c0_i32_0 = arith.constant 0 : i32
    %c0_i32_1 = arith.constant 0 : i32
    return %c0_i32, %c0_i32_0 : i32, i32
  }
  func.func @transform_7(%arg0: i32) -> (i32, i32) {
    %c0_i32 = arith.constant 0 : i32
    %c0_i32_0 = arith.constant 0 : i32
    return %c0_i32, %arg0 : i32, i32
  }
}

</mosaic_0001>

<llo_original>
// kernel: surrogate_net_forward.1
$region0: #{surrogate_net_forward.1}
  #allocation0 [shape = 'u32[]', space=smem, size = 0x4, offset = 0x4, fixed_abs, tag = 'smem constant byte address 0x4 - core index']
  #allocation1 [shape = 'u32[72,128]{1,0:T(1,128)}', space=vmem, size = 0x9000, scoped, tag = 'internal scratch']
  %s0 = inlined_call_operand.hbm [shape: f32[8,201], index: 0, kind: input, shape index: {}]
  %s1 = inlined_call_operand.hbm [shape: bf16[201,256], index: 1, kind: input, shape index: {}]
  %s2 = inlined_call_operand.vmem [shape: f32[1,256], index: 2, kind: input, shape index: {}]
  %s3 = inlined_call_operand.hbm [shape: bf16[256,256], index: 3, kind: input, shape index: {}]
  %s4 = inlined_call_operand.vmem [shape: f32[1,256], index: 4, kind: input, shape index: {}]
  %s5 = inlined_call_operand.vmem [shape: bf16[3,256], index: 5, kind: input, shape index: {}]
  %s6 = inlined_call_operand.vmem [shape: f32[3,1], index: 6, kind: input, shape index: {}]
  %s7 = inlined_call_operand.hbm [shape: f32[3,8], index: 7, kind: output, shape index: {}]
  %s8 = sld [smem:[#allocation0]]
  $region50: #{surrogate_net_forward.1} parent=0
    _
  %s10 = ssub.s32 1, %s8
  %s11 = scalar_select 0, %s10, %s8
  $region1: #{surrogate_net_forward.1} parent=0
    #allocation2 [shape = 'u8[8192]{0}', space=vmem, size = 0x2000, scoped, tag = 'input window, operand 0, single buffered']
    #allocation3 [shape = 's32[1]{0}', space=sflag, size = 0x4, scoped, tag = 'scoped memory for surrogate_net_forward.1']
    #allocation4 [shape = 's32[1]{0}', space=sflag, size = 0x4, scoped, tag = 'scoped memory for surrogate_net_forward.1']
    #allocation5 [shape = 'u8[106496]{0}', space=vmem, size = 0x1a000, scoped, tag = 'input window, operand 1, single buffered']
    #allocation6 [shape = 's32[1]{0}', space=sflag, size = 0x4, scoped, tag = 'scoped memory for surrogate_net_forward.1']
    #allocation7 [shape = 'u8[131072]{0}', space=vmem, size = 0x20000, scoped, tag = 'input window, operand 3, single buffered']
    #allocation8 [shape = 'u8[2048]{0}', space=vmem, size = 0x800, scoped, tag = 'output window, operand 0, single buffered']
    %12 = vsyncpa [#allocation3], 0
    %13 = vsyncpa [#allocation6], 0
    %14 = vsyncpa [#allocation4], 0
    // Predicated region
    $region2: #{surrogate_net_forward.1} parent=1 // pred_check
      _
    $region3: #{surrogate_net_forward.1} parent=1 // pred_check_branch
      %16 = sbr.rel (0) target = $region5
    $region4: #{surrogate_net_forward.1} parent=1 // pred_region
      %18 = vsyncadd [#allocation3], 0
      %s20 = sshll.u32 %s0, 4
      %s21 = int_to_ptr.hbm [resolvable:$true] %s20
      %s22 = sshll.u32 [#allocation2], 4
      %s23 = int_to_ptr.vmem [resolvable:$true] %s22
      %25 = dma.hbm_to_vmem [thread:$0]  %s21, 256, %s23, [#allocation3]
    $region5: #{surrogate_net_forward.1} parent=1 // pred_fallthru
      _
    // Predicated region
    $region6: #{surrogate_net_forward.1} parent=1 // pred_check
      _
    $region7: #{surrogate_net_forward.1} parent=1 // pred_check_branch
      %27 = sbr.rel (0) target = $region9
    $region8: #{surrogate_net_forward.1} parent=1 // pred_region
      %29 = vsyncadd [#allocation6], 0
      %s30 = sshll.u32 %s1, 4
      %s31 = int_to_ptr.hbm [resolvable:$true] %s30
      %s32 = sshll.u32 [#allocation5], 4
      %s33 = int_to_ptr.vmem [resolvable:$true] %s32
      %38 = dma.hbm_to_vmem [thread:$0]  %s31, 3328, %s33, [#allocation6], 128, 128, 8
    $region9: #{surrogate_net_forward.1} parent=1 // pred_fallthru
      _
    // Predicated region
    $region10: #{surrogate_net_forward.1} parent=1 // pred_check
      _
    $region11: #{surrogate_net_forward.1} parent=1 // pred_check_branch
      %40 = sbr.rel (0) target = $region13
    $region12: #{surrogate_net_forward.1} parent=1 // pred_region
      _
    $region13: #{surrogate_net_forward.1} parent=1 // pred_fallthru
      _
    // Predicated region
    $region14: #{surrogate_net_forward.1} parent=1 // pred_check
      _
    $region15: #{surrogate_net_forward.1} parent=1 // pred_check_branch
      %42 = sbr.rel (0) target = $region17
    $region16: #{surrogate_net_forward.1} parent=1 // pred_region
      %44 = vsyncadd [#allocation6], 0
      %s45 = sshll.u32 %s3, 4
      %s46 = int_to_ptr.hbm [resolvable:$true] %s45
      %s47 = sshll.u32 [#allocation7], 4
      %s48 = int_to_ptr.vmem [resolvable:$true] %s47
      %53 = dma.hbm_to_vmem [thread:$0]  %s46, 4096, %s48, [#allocation6], 128, 128, 8
    $region17: #{surrogate_net_forward.1} parent=1 // pred_fallthru
      _
    // Predicated region
    $region18: #{surrogate_net_forward.1} parent=1 // pred_check
      _
    $region19: #{surrogate_net_forward.1} parent=1 // pred_check_branch
      %55 = sbr.rel (0) target = $region21
    $region20: #{surrogate_net_forward.1} parent=1 // pred_region
      _
    $region21: #{surrogate_net_forward.1} parent=1 // pred_fallthru
      _
    // Predicated region
    $region22: #{surrogate_net_forward.1} parent=1 // pred_check
      _
    $region23: #{surrogate_net_forward.1} parent=1 // pred_check_branch
      %57 = sbr.rel (0) target = $region25
    $region24: #{surrogate_net_forward.1} parent=1 // pred_region
      _
    $region25: #{surrogate_net_forward.1} parent=1 // pred_fallthru
      _
    // Predicated region
    $region26: #{surrogate_net_forward.1} parent=1 // pred_check
      _
    $region27: #{surrogate_net_forward.1} parent=1 // pred_check_branch
      %59 = sbr.rel (0) target = $region29
    $region28: #{surrogate_net_forward.1} parent=1 // pred_region
      _
    $region29: #{surrogate_net_forward.1} parent=1 // pred_fallthru
      _
    // Predicated region
    $region30: #{surrogate_net_forward.1} parent=1 // pred_check
      _
    $region31: #{surrogate_net_forward.1} parent=1 // pred_check_branch
      %61 = sbr.rel (0) target = $region33
    $region32: #{surrogate_net_forward.1} parent=1 // pred_region
      %63 = dma.done [#allocation3], 256
    $region33: #{surrogate_net_forward.1} parent=1 // pred_fallthru
      _
    // Predicated region
    $region34: #{surrogate_net_forward.1} parent=1 // pred_check
      _
    $region35: #{surrogate_net_forward.1} parent=1 // pred_check_branch
      %65 = sbr.rel (0) target = $region37
    $region36: #{surrogate_net_forward.1} parent=1 // pred_region
      %67 = dma.done [#allocation6], 3328
    $region37: #{surrogate_net_forward.1} parent=1 // pred_fallthru
      _
    // Predicated region
    $region38: #{surrogate_net_forward.1} parent=1 // pred_check
      _
    $region39: #{surrogate_net_forward.1} parent=1 // pred_check_branch
      %69 = sbr.rel (0) target = $region41
    $region40: #{surrogate_net_forward.1} parent=1 // pred_region
      %71 = dma.done [#allocation6], 4096
    $region41: #{surrogate_net_forward.1} parent=1 // pred_fallthru
      _
    %v73 = vld [vmem:[#allocation2] sm:$0xff]
    %v74 = vld [vmem:[#allocation2 + $0x8] sm:$0xff]
    %v75 = vpack.c.bf16 %v73, %v73
    %v76 = vpack.c.bf16 %v74, %v74
    %v77 = vld [vmem:[#allocation5] sm:$0xff]
    %v78 = vld [vmem:[#allocation5 + $0x8] sm:$0xff]
    %v79 = vld [vmem:[#allocation5 + $0x10] sm:$0xff]
    %v80 = vld [vmem:[#allocation5 + $0x18] sm:$0xff]
    %v81 = vld [vmem:[#allocation5 + $0x20] sm:$0xff]
    %v82 = vld [vmem:[#allocation5 + $0x28] sm:$0xff]
    %v83 = vld [vmem:[#allocation5 + $0x30] sm:$0xff]
    %v84 = vld [vmem:[#allocation5 + $0x38] sm:$0xff]
    %v85 = vld [vmem:[#allocation5 + $0x40] sm:$0xff]
    %v86 = vld [vmem:[#allocation5 + $0x48] sm:$0xff]
    %v87 = vld [vmem:[#allocation5 + $0x50] sm:$0xff]
    %v88 = vld [vmem:[#allocation5 + $0x58] sm:$0xff]
    %v89 = vld [vmem:[#allocation5 + $0x60] sm:$0xff]
    %v90 = vld [vmem:[#allocation5 + $0x68] sm:$0xff]
    %v91 = vld [vmem:[#allocation5 + $0x70] sm:$0xff]
    %v92 = vld [vmem:[#allocation5 + $0x78] sm:$0xff]
    %v93 = vld [vmem:[#allocation5 + $0x80] sm:$0xff]
    %v94 = vld [vmem:[#allocation5 + $0x88] sm:$0xff]
    %v95 = vld [vmem:[#allocation5 + $0x90] sm:$0xff]
    %v96 = vld [vmem:[#allocation5 + $0x98] sm:$0xff]
    %v97 = vld [vmem:[#allocation5 + $0xa0] sm:$0xff]
    %v98 = vld [vmem:[#allocation5 + $0xa8] sm:$0xff]
    %v99 = vld [vmem:[#allocation5 + $0xb0] sm:$0xff]
    %v100 = vld [vmem:[#allocation5 + $0xb8] sm:$0xff]
    %v101 = vld [vmem:[#allocation5 + $0xc0] sm:$0xff]
    %v102 = vld [vmem:[#allocation5 + $0xc8] sm:$0x11]
    %v103 = vld [vmem:[%s2] sm:$0x3]
    %v105 = vperm.slane %v103, 0
    %v106 = vperm.slane %v103, 1
    %v135 = vunpack.c.l.b16 %v77
    %v136 = vunpack.c.h.b16 %v77
    %v137 = vunpack.c.l.b16 %v78
    %v138 = vunpack.c.h.b16 %v78
    %v139 = vunpack.c.l.b16 %v79
    %v140 = vunpack.c.h.b16 %v79
    %v141 = vunpack.c.l.b16 %v80
    %v142 = vunpack.c.h.b16 %v80
    %v143 = vunpack.c.l.b16 %v81
    %v144 = vunpack.c.h.b16 %v81
    %v145 = vunpack.c.l.b16 %v82
    %v146 = vunpack.c.h.b16 %v82
    %v147 = vunpack.c.l.b16 %v83
    %v148 = vunpack.c.h.b16 %v83
    %v149 = vunpack.c.l.b16 %v84
    %v150 = vunpack.c.h.b16 %v84
    %v151 = vunpack.c.l.b16 %v85
    %v152 = vunpack.c.h.b16 %v85
    %v153 = vunpack.c.l.b16 %v86
    %v154 = vunpack.c.h.b16 %v86
    %v155 = vunpack.c.l.b16 %v87
    %v156 = vunpack.c.h.b16 %v87
    %v157 = vunpack.c.l.b16 %v88
    %v158 = vunpack.c.h.b16 %v88
    %v159 = vunpack.c.l.b16 %v89
    %v160 = vunpack.c.h.b16 %v89
    %v161 = vunpack.c.l.b16 %v90
    %v162 = vunpack.c.h.b16 %v90
    %v163 = vunpack.c.l.b16 %v91
    %v164 = vunpack.c.h.b16 %v91
    %v165 = vunpack.c.l.b16 %v92
    %v166 = vunpack.c.h.b16 %v92
    %v167 = vunpack.c.l.b16 %v93
    %v168 = vunpack.c.h.b16 %v93
    %v169 = vunpack.c.l.b16 %v94
    %v170 = vunpack.c.h.b16 %v94
    %v171 = vunpack.c.l.b16 %v95
    %v172 = vunpack.c.h.b16 %v95
    %v173 = vunpack.c.l.b16 %v96
    %v174 = vunpack.c.h.b16 %v96
    %v175 = vunpack.c.l.b16 %v97
    %v176 = vunpack.c.h.b16 %v97
    %v177 = vunpack.c.l.b16 %v98
    %v178 = vunpack.c.h.b16 %v98
    %v179 = vunpack.c.l.b16 %v99
    %v180 = vunpack.c.h.b16 %v99
    %v181 = vunpack.c.l.b16 %v100
    %v182 = vunpack.c.h.b16 %v100
    %v183 = vunpack.c.l.b16 %v101
    %v184 = vunpack.c.h.b16 %v101
    %v185 = vunpack.c.l.b16 %v102
    %v186 = vunpack.c.h.b16 %v102
    %v187 = vpack.c.b16 %v137, %v135
    %v188 = vpack.c.b16 %v138, %v136
    %v189 = vpack.c.b16 %v141, %v139
    %v190 = vpack.c.b16 %v142, %v140
    %v191 = vpack.c.b16 %v145, %v143
    %v192 = vpack.c.b16 %v146, %v144
    %v193 = vpack.c.b16 %v149, %v147
    %v194 = vpack.c.b16 %v150, %v148
    %v195 = vpack.c.b16 %v153, %v151
    %v196 = vpack.c.b16 %v154, %v152
    %v197 = vpack.c.b16 %v157, %v155
    %v198 = vpack.c.b16 %v158, %v156
    %v199 = vpack.c.b16 %v161, %v159
    %v200 = vpack.c.b16 %v162, %v160
    %v201 = vpack.c.b16 %v165, %v163
    %v202 = vpack.c.b16 %v166, %v164
    %v203 = vpack.c.b16 %v169, %v167
    %v204 = vpack.c.b16 %v170, %v168
    %v205 = vpack.c.b16 %v173, %v171
    %v206 = vpack.c.b16 %v174, %v172
    %v207 = vpack.c.b16 %v177, %v175
    %v208 = vpack.c.b16 %v178, %v176
    %v209 = vpack.c.b16 %v181, %v179
    %v210 = vpack.c.b16 %v182, %v180
    %v211 = vpack.c.b16 %v185, %v183
    %v212 = vpack.c.b16 %v186, %v184
    %vm237 = vcmask 596992
    %v239 = vsel %vm237, %v76, 0
    %vm241 = vcmask 1043456
    %vm242 = vcmask 1044480
    %v243 = vsel %vm241, 4294967295, 65535
    %v244 = vsel %vm242, %v243, 0
    %v246 = vand.u32 %v211, %v244
    %v249 = vand.u32 %v212, %v244
    %251 = vmatpush.bf16.msra.mxu0 %v201
    %252 = vmatpush.bf16.msra.mxu0 %v199
    %253 = vmatpush.bf16.msra.mxu0 %v197
    %254 = vmatpush.bf16.msra.mxu0 %v195
    %255 = vmatpush.bf16.msra.mxu0 %v193
    %256 = vmatpush.bf16.msra.mxu0 %v191
    %257 = vmatpush.bf16.msra.mxu0 %v189
    %258 = vmatpush.bf16.msra.mxu0 %v187
    %259 = vmatmul.bf16.gmra.mxu0 %v75
    %v260 = vpop.f32.mrf.mxu0
    %v261 = vadd.f32 %v105, %v260
    %v262 = vpop.f32.mrf.mxu0
    %263 = vdwg.mxu0
    %264 = vmatpush.bf16.msra.mxu0 0
    %265 = vmatpush.bf16.msra.mxu0 0
    %266 = vmatpush.bf16.msra.mxu0 0
    %267 = vmatpush.bf16.msra.mxu0 %v246
    %268 = vmatpush.bf16.msra.mxu0 %v209
    %269 = vmatpush.bf16.msra.mxu0 %v207
    %270 = vmatpush.bf16.msra.mxu0 %v205
    %271 = vmatpush.bf16.msra.mxu0 %v203
    %272 = vmatmul.bf16.gmra.mxu0 %v239
    %v273 = vpop.f32.mrf.mxu0
    %v274 = vadd.f32 %v261, %v273
    %v275 = vpop.f32.mrf.mxu0
    %276 = vdwg.mxu0
    %277 = vmatpush.bf16.msra.mxu0 %v202
    %278 = vmatpush.bf16.msra.mxu0 %v200
    %279 = vmatpush.bf16.msra.mxu0 %v198
    %280 = vmatpush.bf16.msra.mxu0 %v196
    %281 = vmatpush.bf16.msra.mxu0 %v194
    %282 = vmatpush.bf16.msra.mxu0 %v192
    %283 = vmatpush.bf16.msra.mxu0 %v190
    %284 = vmatpush.bf16.msra.mxu0 %v188
    %285 = vmatmul.bf16.gmra.mxu0 %v75
    %v286 = vpop.f32.mrf.mxu0
    %v287 = vadd.f32 %v106, %v286
    %v288 = vpop.f32.mrf.mxu0
    %289 = vdwg.mxu0
    %290 = vmatpush.bf16.msra.mxu0 0
    %291 = vmatpush.bf16.msra.mxu0 0
    %292 = vmatpush.bf16.msra.mxu0 0
    %293 = vmatpush.bf16.msra.mxu0 %v249
    %294 = vmatpush.bf16.msra.mxu0 %v210
    %295 = vmatpush.bf16.msra.mxu0 %v208
    %296 = vmatpush.bf16.msra.mxu0 %v206
    %297 = vmatpush.bf16.msra.mxu0 %v204
    %298 = vmatmul.bf16.gmra.mxu0 %v239
    %v299 = vpop.f32.mrf.mxu0
    %v300 = vadd.f32 %v287, %v299
    %v301 = vpop.f32.mrf.mxu0
    %302 = vdwg.mxu0
    %v303 = vmax.f32 %v274, 0.0
    %v304 = vmax.f32 %v300, 0.0
    %v305 = vpack.c.bf16 %v303, %v303
    %v306 = vpack.c.bf16 %v304, %v304
    %v307 = vld [vmem:[#allocation7] sm:$0xff]
    %v308 = vld [vmem:[#allocation7 + $0x8] sm:$0xff]
    %v309 = vld [vmem:[#allocation7 + $0x10] sm:$0xff]
    %v310 = vld [vmem:[#allocation7 + $0x18] sm:$0xff]
    %v311 = vld [vmem:[#allocation7 + $0x20] sm:$0xff]
    %v312 = vld [vmem:[#allocation7 + $0x28] sm:$0xff]
    %v313 = vld [vmem:[#allocation7 + $0x30] sm:$0xff]
    %v314 = vld [vmem:[#allocation7 + $0x38] sm:$0xff]
    %v315 = vld [vmem:[#allocation7 + $0x40] sm:$0xff]
    %v316 = vld [vmem:[#allocation7 + $0x48] sm:$0xff]
    %v317 = vld [vmem:[#allocation7 + $0x50] sm:$0xff]
    %v318 = vld [vmem:[#allocation7 + $0x58] sm:$0xff]
    %v319 = vld [vmem:[#allocation7 + $0x60] sm:$0xff]
    %v320 = vld [vmem:[#allocation7 + $0x68] sm:$0xff]
    %v321 = vld [vmem:[#allocation7 + $0x70] sm:$0xff]
    %v322 = vld [vmem:[#allocation7 + $0x78] sm:$0xff]
    %v323 = vld [vmem:[#allocation7 + $0x80] sm:$0xff]
    %v324 = vld [vmem:[#allocation7 + $0x88] sm:$0xff]
    %v325 = vld [vmem:[#allocation7 + $0x90] sm:$0xff]
    %v326 = vld [vmem:[#allocation7 + $0x98] sm:$0xff]
    %v327 = vld [vmem:[#allocation7 + $0xa0] sm:$0xff]
    %v328 = vld [vmem:[#allocation7 + $0xa8] sm:$0xff]
    %v329 = vld [vmem:[#allocation7 + $0xb0] sm:$0xff]
    %v330 = vld [vmem:[#allocation7 + $0xb8] sm:$0xff]
    %v331 = vld [vmem:[#allocation7 + $0xc0] sm:$0xff]
    %v332 = vld [vmem:[#allocation7 + $0xc8] sm:$0xff]
    %v333 = vld [vmem:[#allocation7 + $0xd0] sm:$0xff]
    %v334 = vld [vmem:[#allocation7 + $0xd8] sm:$0xff]
    %v335 = vld [vmem:[#allocation7 + $0xe0] sm:$0xff]
    %v336 = vld [vmem:[#allocation7 + $0xe8] sm:$0xff]
    %v337 = vld [vmem:[#allocation7 + $0xf0] sm:$0xff]
    %v338 = vld [vmem:[#allocation7 + $0xf8] sm:$0xff]
    %v339 = vld [vmem:[%s4] sm:$0x3]
    %v341 = vperm.slane %v339, 0
    %v342 = vperm.slane %v339, 1
    %v377 = vunpack.c.l.b16 %v307
    %v378 = vunpack.c.h.b16 %v307
    %v379 = vunpack.c.l.b16 %v308
    %v380 = vunpack.c.h.b16 %v308
    %v381 = vunpack.c.l.b16 %v309
    %v382 = vunpack.c.h.b16 %v309
    %v383 = vunpack.c.l.b16 %v310
    %v384 = vunpack.c.h.b16 %v310
    %v385 = vunpack.c.l.b16 %v311
    %v386 = vunpack.c.h.b16 %v311
    %v387 = vunpack.c.l.b16 %v312
    %v388 = vunpack.c.h.b16 %v312
    %v389 = vunpack.c.l.b16 %v313
    %v390 = vunpack.c.h.b16 %v313
    %v391 = vunpack.c.l.b16 %v314
    %v392 = vunpack.c.h.b16 %v314
    %v393 = vunpack.c.l.b16 %v315
    %v394 = vunpack.c.h.b16 %v315
    %v395 = vunpack.c.l.b16 %v316
    %v396 = vunpack.c.h.b16 %v316
    %v397 = vunpack.c.l.b16 %v317
    %v398 = vunpack.c.h.b16 %v317
    %v399 = vunpack.c.l.b16 %v318
    %v400 = vunpack.c.h.b16 %v318
    %v401 = vunpack.c.l.b16 %v319
    %v402 = vunpack.c.h.b16 %v319
    %v403 = vunpack.c.l.b16 %v320
    %v404 = vunpack.c.h.b16 %v320
    %v405 = vunpack.c.l.b16 %v321
    %v406 = vunpack.c.h.b16 %v321
    %v407 = vunpack.c.l.b16 %v322
    %v408 = vunpack.c.h.b16 %v322
    %v409 = vunpack.c.l.b16 %v323
    %v410 = vunpack.c.h.b16 %v323
    %v411 = vunpack.c.l.b16 %v324
    %v412 = vunpack.c.h.b16 %v324
    %v413 = vunpack.c.l.b16 %v325
    %v414 = vunpack.c.h.b16 %v325
    %v415 = vunpack.c.l.b16 %v326
    %v416 = vunpack.c.h.b16 %v326
    %v417 = vunpack.c.l.b16 %v327
    %v418 = vunpack.c.h.b16 %v327
    %v419 = vunpack.c.l.b16 %v328
    %v420 = vunpack.c.h.b16 %v328
    %v421 = vunpack.c.l.b16 %v329
    %v422 = vunpack.c.h.b16 %v329
    %v423 = vunpack.c.l.b16 %v330
    %v424 = vunpack.c.h.b16 %v330
    %v425 = vunpack.c.l.b16 %v331
    %v426 = vunpack.c.h.b16 %v331
    %v427 = vunpack.c.l.b16 %v332
    %v428 = vunpack.c.h.b16 %v332
    %v429 = vunpack.c.l.b16 %v333
    %v430 = vunpack.c.h.b16 %v333
    %v431 = vunpack.c.l.b16 %v334
    %v432 = vunpack.c.h.b16 %v334
    %v433 = vunpack.c.l.b16 %v335
    %v434 = vunpack.c.h.b16 %v335
    %v435 = vunpack.c.l.b16 %v336
    %v436 = vunpack.c.h.b16 %v336
    %v437 = vunpack.c.l.b16 %v337
    %v438 = vunpack.c.h.b16 %v337
    %v439 = vunpack.c.l.b16 %v338
    %v440 = vunpack.c.h.b16 %v338
    %v441 = vpack.c.b16 %v379, %v377
    %v442 = vpack.c.b16 %v380, %v378
    %v443 = vpack.c.b16 %v383, %v381
    %v444 = vpack.c.b16 %v384, %v382
    %v445 = vpack.c.b16 %v387, %v385
    %v446 = vpack.c.b16 %v388, %v386
    %v447 = vpack.c.b16 %v391, %v389
    %v448 = vpack.c.b16 %v392, %v390
    %v449 = vpack.c.b16 %v395, %v393
    %v450 = vpack.c.b16 %v396, %v394
    %v451 = vpack.c.b16 %v399, %v397
    %v452 = vpack.c.b16 %v400, %v398
    %v453 = vpack.c.b16 %v403, %v401
    %v454 = vpack.c.b16 %v404, %v402
    %v455 = vpack.c.b16 %v407, %v405
    %v456 = vpack.c.b16 %v408, %v406
    %v457 = vpack.c.b16 %v411, %v409
    %v458 = vpack.c.b16 %v412, %v410
    %v459 = vpack.c.b16 %v415, %v413
    %v460 = vpack.c.b16 %v416, %v414
    %v461 = vpack.c.b16 %v419, %v417
    %v462 = vpack.c.b16 %v420, %v418
    %v463 = vpack.c.b16 %v423, %v421
    %v464 = vpack.c.b16 %v424, %v422
    %v465 = vpack.c.b16 %v427, %v425
    %v466 = vpack.c.b16 %v428, %v426
    %v467 = vpack.c.b16 %v431, %v429
    %v468 = vpack.c.b16 %v432, %v430
    %v469 = vpack.c.b16 %v435, %v433
    %v470 = vpack.c.b16 %v436, %v434
    %v471 = vpack.c.b16 %v439, %v437
    %v472 = vpack.c.b16 %v440, %v438
    %505 = vmatpush.bf16.msra.mxu0 %v455
    %506 = vmatpush.bf16.msra.mxu0 %v453
    %507 = vmatpush.bf16.msra.mxu0 %v451
    %508 = vmatpush.bf16.msra.mxu0 %v449
    %509 = vmatpush.bf16.msra.mxu0 %v447
    %510 = vmatpush.bf16.msra.mxu0 %v445
    %511 = vmatpush.bf16.msra.mxu0 %v443
    %512 = vmatpush.bf16.msra.mxu0 %v441
    %513 = vmatmul.bf16.gmra.mxu0 %v305
    %v514 = vpop.f32.mrf.mxu0
    %v515 = vadd.f32 %v341, %v514
    %v516 = vpop.f32.mrf.mxu0
    %517 = vdwg.mxu0
    %518 = vmatpush.bf16.msra.mxu0 %v471
    %519 = vmatpush.bf16.msra.mxu0 %v469
    %520 = vmatpush.bf16.msra.mxu0 %v467
    %521 = vmatpush.bf16.msra.mxu0 %v465
    %522 = vmatpush.bf16.msra.mxu0 %v463
    %523 = vmatpush.bf16.msra.mxu0 %v461
    %524 = vmatpush.bf16.msra.mxu0 %v459
    %525 = vmatpush.bf16.msra.mxu0 %v457
    %526 = vmatmul.bf16.gmra.mxu0 %v306
    %v527 = vpop.f32.mrf.mxu0
    %v528 = vadd.f32 %v515, %v527
    %v529 = vpop.f32.mrf.mxu0
    %530 = vdwg.mxu0
    %531 = vmatpush.bf16.msra.mxu0 %v456
    %532 = vmatpush.bf16.msra.mxu0 %v454
    %533 = vmatpush.bf16.msra.mxu0 %v452
    %534 = vmatpush.bf16.msra.mxu0 %v450
    %535 = vmatpush.bf16.msra.mxu0 %v448
    %536 = vmatpush.bf16.msra.mxu0 %v446
    %537 = vmatpush.bf16.msra.mxu0 %v444
    %538 = vmatpush.bf16.msra.mxu0 %v442
    %539 = vmatmul.bf16.gmra.mxu0 %v305
    %v540 = vpop.f32.mrf.mxu0
    %v541 = vadd.f32 %v342, %v540
    %v542 = vpop.f32.mrf.mxu0
    %543 = vdwg.mxu0
    %544 = vmatpush.bf16.msra.mxu0 %v472
    %545 = vmatpush.bf16.msra.mxu0 %v470
    %546 = vmatpush.bf16.msra.mxu0 %v468
    %547 = vmatpush.bf16.msra.mxu0 %v466
    %548 = vmatpush.bf16.msra.mxu0 %v464
    %549 = vmatpush.bf16.msra.mxu0 %v462
    %550 = vmatpush.bf16.msra.mxu0 %v460
    %551 = vmatpush.bf16.msra.mxu0 %v458
    %552 = vmatmul.bf16.gmra.mxu0 %v306
    %v553 = vpop.f32.mrf.mxu0
    %v554 = vadd.f32 %v541, %v553
    %v555 = vpop.f32.mrf.mxu0
    %556 = vdwg.mxu0
    %v557 = vmax.f32 %v528, 0.0
    %v558 = vmax.f32 %v554, 0.0
    %v559 = vpack.c.bf16 %v557, %v557
    %v560 = vpack.c.bf16 %v558, %v558
    %v561 = vld [vmem:[%s5] sm:$0xf]
    %v562 = vld [vmem:[%s6] sm:$0x7]
    %564 = vset.pattern.permute.xlu0 0
    %565 = vperm.xlu0 %564, %v562
    %v566 = vpop.permute.xlu0 %565
    %569 = vst [vmem:[#allocation1] ss:$4 sm:$0xff] %v561
    %v570 = vld.sshfl [vmem:[#allocation1] sm:$0xff pattern:$0x73625140]
    %v571 = vld.sshfl [vmem:[#allocation1 + $0x8] sm:$0xff pattern:$0x73625140]
    %574 = vmatpush.bf16.xpose.msra.mxu0 0
    %575 = vmatpush.bf16.xpose.msra.mxu0 0
    %576 = vmatpush.bf16.xpose.msra.mxu0 0
    %577 = vmatpush.bf16.xpose.msra.mxu0 0
    %578 = vmatpush.bf16.xpose.msra.mxu0 0
    %579 = vmatpush.bf16.xpose.msra.mxu0 0
    %580 = vmatpush.bf16.xpose.msra.mxu0 0
    %581 = vmatpush.bf16.xpose.msra.mxu0 %v559
    %582 = vmatmul.bf16.gmra.mxu0 %v570
    %v583 = vpop.f32.mrf.mxu0
    %v584 = vadd.f32 %v566, %v583
    %v585 = vpop.f32.mrf.mxu0
    %586 = vdwg.mxu0
    %587 = vmatpush.bf16.xpose.msra.mxu0 0
    %588 = vmatpush.bf16.xpose.msra.mxu0 0
    %589 = vmatpush.bf16.xpose.msra.mxu0 0
    %590 = vmatpush.bf16.xpose.msra.mxu0 0
    %591 = vmatpush.bf16.xpose.msra.mxu0 0
    %592 = vmatpush.bf16.xpose.msra.mxu0 0
    %593 = vmatpush.bf16.xpose.msra.mxu0 0
    %594 = vmatpush.bf16.xpose.msra.mxu0 %v560
    %595 = vmatmul.bf16.gmra.mxu0 %v571
    %v596 = vpop.f32.mrf.mxu0
    %v597 = vadd.f32 %v584, %v596
    %v598 = vpop.f32.mrf.mxu0
    %599 = vdwg.mxu0
    %vm600 = vcmask 59392
    %601 = vst.msk [vmem:[#allocation8] sm:$0x7] %vm600, %v597
    // Predicated region
    $region42: #{surrogate_net_forward.1} parent=1 // pred_check
      _
    $region43: #{surrogate_net_forward.1} parent=1 // pred_check_branch
      %603 = sbr.rel (0) target = $region45
    $region44: #{surrogate_net_forward.1} parent=1 // pred_region
      %605 = vsyncadd [#allocation4], 0
      %s607 = sshll.u32 [#allocation8], 4
      %s608 = int_to_ptr.vmem [resolvable:$true] %s607
      %s609 = sshll.u32 %s7, 4
      %s610 = int_to_ptr.hbm [resolvable:$true] %s609
      %612 = dma.vmem_to_hbm [thread:$0]  %s608, 64, %s610, [#allocation4]
    $region45: #{surrogate_net_forward.1} parent=1 // pred_fallthru
      _
    // Predicated region
    $region46: #{surrogate_net_forward.1} parent=1 // pred_check
      _
    $region47: #{surrogate_net_forward.1} parent=1 // pred_check_branch
      %614 = sbr.rel (0) target = $region49
    $region48: #{surrogate_net_forward.1} parent=1 // pred_region
      %616 = dma.done [#allocation4], 64
    $region49: #{surrogate_net_forward.1} parent=1 // pred_fallthru
      _
    %617 = vsyncpa [#allocation3], 1
    %618 = vsyncpa [#allocation6], 1
    %619 = vsyncpa [#allocation4], 1

</llo_original>
